<compile_context>
chip_gen: v7x
topology: tpu7x:2x2x1
jax: 0.10.0
libtpu: 0.0.40
codegen_flags: <defaults>
</compile_context>

<pallas_src>
import jax
import jax.numpy as jnp
from jax.experimental import pallas as pl
from jax.experimental.pallas import tpu as pltpu


# ---------------------------------------------------------------------------
# Kernel: one fused contraction per (batch, hw-tile), lane-dense stores.
# ---------------------------------------------------------------------------
def _energy_kernel(feat_ref, wfull_ref, out_ref, energy_ref):
    c = feat_ref.shape[1]
    npatch = energy_ref.shape[1]

    feat = feat_ref[0]                                        # (c, t_hw), feature dtype
    wfull = wfull_ref[0]                                      # (np+1, c), f32

    # Single MXU pass: rows 0..np-1 -> energy, row np -> corr (mean folded in).
    res = jnp.dot(wfull, feat.astype(jnp.float32),
                  preferred_element_type=jnp.float32)         # (np+1, t_hw)

    energy_ref[0] = res[:npatch, :].astype(energy_ref.dtype)
    # Fused output concat: pass features through, append correlation channel.
    out_ref[0, :c, :] = feat
    out_ref[0, c:c + 1, :] = res[npatch:npatch + 1, :].astype(out_ref.dtype)


# ---------------------------------------------------------------------------
# VMEM / tiling helpers (generation-aware).
# ---------------------------------------------------------------------------
def _vmem_caps():
    """Returns (tile budget bytes, vmem_limit_bytes) for the current TPU gen."""
    try:
        cap = int(getattr(pltpu.get_tpu_info(), "vmem_capacity_bytes", 0)) or (64 << 20)
    except Exception:
        cap = 64 << 20                      # conservative default: v7x per-TC VMEM
    if cap > (64 << 20):                    # v5e / v6e (128 MiB VMEM)
        return 48 << 20, 64 << 20
    return 20 << 20, 32 << 20               # v7x (64 MiB) or unknown


def _tile_vmem_bytes(t_hw, c, npatch, feat_bytes):
    """Per-grid-step footprint, incl. double-buffered blocks and intermediates."""
    feat_blk = t_hw * c * feat_bytes
    out_blk = t_hw * (c + 1) * feat_bytes
    energy_blk = t_hw * npatch * 4
    wfull_blk = (npatch + 1) * c * 4
    # in-kernel intermediates: f32 copy of feat + (np+1, t_hw) f32 result
    interm = t_hw * c * 4 + t_hw * (npatch + 1) * 4
    return 2 * (feat_blk + out_blk + energy_blk + wfull_blk) + interm


def _pick_hw_tile(hw, c, npatch, feat_bytes, bs, budget_bytes, max_tile=16384):
    """Largest 128-multiple hw tile that fits the budget (cdiv grid, no need to
    divide hw); keeps >= 2 grid steps when bs == 1 for v7x's two TensorCores."""
    if hw <= 128:
        return hw                           # full-extent block is always legal
    hw_pad = -(-hw // 128) * 128
    upper = min(hw_pad, max_tile)
    if bs == 1:
        upper = min(upper, ((hw - 1) // 128) * 128)
    upper = max(upper, 128)
    fitting = [t for t in range(128, upper + 1, 128)
               if _tile_vmem_bytes(t, c, npatch, feat_bytes) <= budget_bytes]
    return max(fitting) if fitting else 128


# ---------------------------------------------------------------------------
# Forward wrapper.
# ---------------------------------------------------------------------------
def dynamic_similarity_matcher(features, patches, params):
    """features: (bs, c, h, w), patches: (np, bs, c)
       -> (out (bs, c+1, h, w), energy (bs, hw, np))  [PyTorch forward semantics]"""
    bs, c, h, w = features.shape
    hw = h * w
    npatch = patches.shape[0]
    hp = jax.lax.Precision.HIGHEST

    wq, wk = params["wq"], params["wk"]                       # (p, c)
    w1, b1 = params["w1"], params["b1"]                       # (d, p), (d,)
    w2, b2 = params["w2"], params["b2"]                       # (p, d), (p,)

    # Patch-side chain + Wq fold (tiny: bs*np rows) in plain jnp.
    pf = jnp.einsum("nbc,pc->nbp", patches.astype(jnp.float32), wk, precision=hp)
    h1 = jnp.maximum(jnp.einsum("nbp,dp->nbd", pf, w1, precision=hp) + b1, 0.0)
    ca = jnp.tanh(jnp.einsum("nbd,pd->nbp", h1, w2, precision=hp) + b2)
    kmod = pf * (ca + 1.0)                                    # (np, bs, p)
    w_comb = jnp.einsum("nbp,pc->bnc", kmod, wq, precision=hp)        # (bs, np, c)
    w_full = jnp.concatenate(
        [w_comb, jnp.mean(w_comb, axis=1, keepdims=True)], axis=1)    # (bs, np+1, c)
    w_full = w_full.astype(jnp.float32)

    feat_hw_last = features.reshape(bs, c, hw)                # free reshape, hw on lanes

    budget_bytes, vmem_limit = _vmem_caps()
    t_hw = _pick_hw_tile(hw, c, npatch, features.dtype.itemsize, bs, budget_bytes)
    n_hw_tiles = pl.cdiv(hw, t_hw)

    out_flat, energy_np_hw = pl.pallas_call(
        _energy_kernel,
        out_shape=(
            jax.ShapeDtypeStruct((bs, c + 1, hw), features.dtype),
            jax.ShapeDtypeStruct((bs, npatch, hw), jnp.float32),
        ),
        grid_spec=pltpu.PrefetchScalarGridSpec(
            num_scalar_prefetch=0,
            grid=(bs, n_hw_tiles),
            in_specs=[
                pl.BlockSpec((1, c, t_hw), lambda b, t: (b, 0, t)),
                pl.BlockSpec((1, npatch + 1, c), lambda b, t: (b, 0, 0)),
            ],
            out_specs=[
                pl.BlockSpec((1, c + 1, t_hw), lambda b, t: (b, 0, t)),
                pl.BlockSpec((1, npatch, t_hw), lambda b, t: (b, 0, t)),
            ],
        ),
        compiler_params=pltpu.CompilerParams(
            dimension_semantics=("parallel", "parallel"),
            vmem_limit_bytes=vmem_limit),
    )(feat_hw_last, w_full)

    out = out_flat.reshape(bs, c + 1, h, w)
    # Module contract returns energy as (bs, hw, np); consumers that accept the
    # lane-dense (bs, np, hw) layout could use energy_np_hw directly and skip this.
    energy = energy_np_hw.transpose(0, 2, 1)
    return out, energy


# ---------------------------------------------------------------------------
# Parameter init mirroring the PyTorch module.
# ---------------------------------------------------------------------------
def _xavier_uniform(key, shape):
    fan_out, fan_in = shape
    bound = (6.0 / (fan_in + fan_out)) ** 0.5
    return jax.random.uniform(key, shape, jnp.float32, -bound, bound)


def init_params(key, hidden_dim, proj_dim, dynamic_proj_dim):
    ks = jax.random.split(key, 6)
    # nn.Linear weight shape is (out_features, in_features); biases default-init.
    wq = _xavier_uniform(ks[0], (proj_dim, hidden_dim))
    wk = _xavier_uniform(ks[1], (proj_dim, hidden_dim))
    w1 = _xavier_uniform(ks[2], (dynamic_proj_dim, proj_dim))
    w2 = _xavier_uniform(ks[3], (proj_dim, dynamic_proj_dim))
    b1 = jax.random.uniform(ks[4], (dynamic_proj_dim,), jnp.float32,
                            -1.0 / proj_dim ** 0.5, 1.0 / proj_dim ** 0.5)
    b2 = jax.random.uniform(ks[5], (proj_dim,), jnp.float32,
                            -1.0 / dynamic_proj_dim ** 0.5,
                            1.0 / dynamic_proj_dim ** 0.5)
    return {"wq": wq, "wk": wk, "w1": w1, "b1": b1, "w2": w2, "b2": b2}


def _reference(features, patches, params):
    """Pure-JAX f32 reference mirroring the PyTorch forward exactly."""
    bs, c, h, w = features.shape
    hp = jax.lax.Precision.HIGHEST
    feat = features.reshape(bs, c, h * w).transpose(2, 0, 1)             # (hw, bs, c)
    proj_feat = jnp.einsum("qbc,pc->qbp", feat, params["wq"], precision=hp)
    patches_feat = jnp.einsum("nbc,pc->nbp", patches, params["wk"], precision=hp)
    hidden = jnp.maximum(
        jnp.einsum("nbp,dp->nbd", patches_feat, params["w1"], precision=hp)
        + params["b1"], 0.0)
    patches_ca = jnp.tanh(
        jnp.einsum("nbd,pd->nbp", hidden, params["w2"], precision=hp)
        + params["b2"])
    proj_b = proj_feat.transpose(1, 0, 2)                                # (bs, hw, p)
    key_b = (patches_feat * (patches_ca + 1.0)).transpose(1, 2, 0)       # (bs, p, np)
    energy = jnp.einsum("bqp,bpk->bqk", proj_b, key_b, precision=hp)     # (bs, hw, np)
    corr = energy.mean(axis=-1, keepdims=True)
    out = jnp.concatenate([feat.transpose(1, 0, 2), corr], axis=-1)      # (bs, hw, c+1)
    out = out.transpose(0, 2, 1).reshape(bs, c + 1, h, w)
    return out, energy


if __name__ == "__main__":
    hidden_dim, proj_dim, dynamic_proj_dim = 4, 32, 16
    bs, h, w, num_patches = 2, 16, 16, 8

    key = jax.random.PRNGKey(0)
    k_feat, k_patch, k_param = jax.random.split(key, 3)
    features = jax.random.normal(k_feat, (bs, hidden_dim, h, w), jnp.float32)
    patches = jax.random.normal(k_patch, (num_patches, bs, hidden_dim), jnp.float32)
    params = init_params(k_param, hidden_dim, proj_dim, dynamic_proj_dim)

    out, energy = dynamic_similarity_matcher(features, patches, params)
    jax.block_until_ready((out, energy))

    out_ref, energy_ref = _reference(features, patches, params)
    assert out.shape == (bs, hidden_dim + 1, h, w)
    assert energy.shape == (bs, h * w, num_patches)
    # f32 operands throughout (no bf16 casts) -> much tighter tolerance than before.
    assert jnp.allclose(energy, energy_ref, atol=2e-2, rtol=2e-2)
    assert jnp.allclose(out, out_ref, atol=2e-2, rtol=2e-2)

    print("KERNEL_OK")
</pallas_src>

<mosaic_0001>
module attributes {stable_mosaic.version = 11 : i64} {
  func.func @_energy_kernel(%arg0: i32, %arg1: i32, %arg2: memref<1x4x256xf32, #tpu.memory_space<vmem>>, %arg3: memref<1x9x4xf32, #tpu.memory_space<vmem>>, %arg4: memref<1x5x256xf32, #tpu.memory_space<vmem>>, %arg5: memref<1x8x256xf32, #tpu.memory_space<vmem>>) attributes {dimension_semantics = [#tpu.dimension_semantics<parallel>, #tpu.dimension_semantics<parallel>], iteration_bounds = array<i64: 2, 1>, scalar_prefetch = 0 : i64, scratch_operands = 0 : i64, tpu.core_type = #tpu.core_type<tc>, window_params = [{transform_indices = @transform_0, window_bounds = array<i64: 1, 4, 256>}, {transform_indices = @transform_1, window_bounds = array<i64: 1, 9, 4>}, {transform_indices = @transform_2, window_bounds = array<i64: 1, 5, 256>}, {transform_indices = @transform_3, window_bounds = array<i64: 1, 8, 256>}]} {
    %c0 = arith.constant 0 : index
    %c0_0 = arith.constant 0 : index
    %c0_1 = arith.constant 0 : index
    %0 = vector.load %arg2[%c0, %c0_0, %c0_1] : memref<1x4x256xf32, #tpu.memory_space<vmem>>, vector<1x4x256xf32>
    %1 = vector.shape_cast %0 : vector<1x4x256xf32> to vector<4x256xf32>
    %c0_2 = arith.constant 0 : index
    %c0_3 = arith.constant 0 : index
    %c0_4 = arith.constant 0 : index
    %2 = vector.load %arg3[%c0_2, %c0_3, %c0_4] : memref<1x9x4xf32, #tpu.memory_space<vmem>>, vector<1x9x4xf32>
    %3 = vector.shape_cast %2 : vector<1x9x4xf32> to vector<9x4xf32>
    %cst = arith.constant dense<0.000000e+00> : vector<9x256xf32>
    %4 = tpu.matmul %3, %1, %cst {dimension_numbers = #tpu.dot_dimension_numbers<[1], [0], [0], [1], [0, 0, 1, 1], [], []>} : vector<9x4xf32>, vector<4x256xf32>, vector<9x256xf32> -> vector<9x256xf32>
    %5 = vector.extract_strided_slice %4 {offsets = [0, 0], sizes = [8, 256], strides = [1, 1]} : vector<9x256xf32> to vector<8x256xf32>
    %c0_5 = arith.constant 0 : index
    %c0_6 = arith.constant 0 : index
    %c0_7 = arith.constant 0 : index
    %6 = vector.load %arg5[%c0_5, %c0_6, %c0_7] : memref<1x8x256xf32, #tpu.memory_space<vmem>>, vector<1x8x256xf32>
    %7 = vector.shape_cast %6 : vector<1x8x256xf32> to vector<8x256xf32>
    %8 = vector.shape_cast %5 : vector<8x256xf32> to vector<1x8x256xf32>
    tpu.vector_store %arg5[%c0_5, %c0_6, %c0_7], %8 {strides = array<i32>} : memref<1x8x256xf32, #tpu.memory_space<vmem>>, vector<1x8x256xf32>,
    %c0_8 = arith.constant 0 : index
    %c0_9 = arith.constant 0 : index
    %c0_10 = arith.constant 0 : index
    %9 = vector.load %arg4[%c0_8, %c0_9, %c0_10] : memref<1x5x256xf32, #tpu.memory_space<vmem>>, vector<1x4x256xf32>
    %10 = vector.shape_cast %9 : vector<1x4x256xf32> to vector<4x256xf32>
    %11 = vector.shape_cast %1 : vector<4x256xf32> to vector<1x4x256xf32>
    tpu.vector_store %arg4[%c0_8, %c0_9, %c0_10], %11 {strides = array<i32>} : memref<1x5x256xf32, #tpu.memory_space<vmem>>, vector<1x4x256xf32>,
    %12 = vector.extract_strided_slice %4 {offsets = [8, 0], sizes = [1, 256], strides = [1, 1]} : vector<9x256xf32> to vector<1x256xf32>
    %c0_11 = arith.constant 0 : index
    %c4 = arith.constant 4 : index
    %c0_12 = arith.constant 0 : index
    %13 = vector.load %arg4[%c0_11, %c4, %c0_12] : memref<1x5x256xf32, #tpu.memory_space<vmem>>, vector<1x1x256xf32>
    %14 = vector.shape_cast %13 : vector<1x1x256xf32> to vector<1x256xf32>
    %15 = vector.shape_cast %12 : vector<1x256xf32> to vector<1x1x256xf32>
    tpu.vector_store %arg4[%c0_11, %c4, %c0_12], %15 {strides = array<i32>} : memref<1x5x256xf32, #tpu.memory_space<vmem>>, vector<1x1x256xf32>,
    return
  }
  func.func @transform_0(%arg0: i32, %arg1: i32) -> (i32, i32, i32) {
    %c0_i32 = arith.constant 0 : i32
    %c0_i32_0 = arith.constant 0 : i32
    return %arg0, %c0_i32, %arg1 : i32, i32, i32
  }
  func.func @transform_1(%arg0: i32, %arg1: i32) -> (i32, i32, i32) {
    %c0_i32 = arith.constant 0 : i32
    %c0_i32_0 = arith.constant 0 : i32
    %c0_i32_1 = arith.constant 0 : i32
    return %arg0, %c0_i32, %c0_i32_0 : i32, i32, i32
  }
  func.func @transform_2(%arg0: i32, %arg1: i32) -> (i32, i32, i32) {
    %c0_i32 = arith.constant 0 : i32
    %c0_i32_0 = arith.constant 0 : i32
    return %arg0, %c0_i32, %arg1 : i32, i32, i32
  }
  func.func @transform_3(%arg0: i32, %arg1: i32) -> (i32, i32, i32) {
    %c0_i32 = arith.constant 0 : i32
    %c0_i32_0 = arith.constant 0 : i32
    return %arg0, %c0_i32, %arg1 : i32, i32, i32
  }
}

</mosaic_0001>

<llo_original>
// kernel: tpu_custom_call.1
$region0: #{tpu_custom_call.1}
  #allocation0 [shape = 'u32[]', space=smem, size = 0x4, offset = 0x4, fixed_abs, tag = 'smem constant byte address 0x4 - core index']
  #allocation1 [shape = 'u32[144,128]{1,0:T(1,128)}', space=vmem, size = 0x12000, scoped, tag = 'internal scratch']
  %s0 = inlined_call_operand.vmem [shape: f32[2,4,256], index: 0, kind: input, shape index: {}]
  %s1 = inlined_call_operand.vmem [shape: f32[2,9,4], index: 1, kind: input, shape index: {}]
  %s2 = inlined_call_operand.vmem [shape: f32[2,5,256], index: 2, kind: output, shape index: {0}]
  %s3 = inlined_call_operand.hbm [shape: f32[2,8,256], index: 3, kind: output, shape index: {1}]
  %4 = xla_tuple %s2, %s3
  %s5 = sld [smem:[#allocation0]]
  $region49: #{tpu_custom_call.1} parent=0
    _
  %s7 = ssub.s32 1, %s5
  %s8 = scalar_select 0, %s7, %s5
  $region1: #{tpu_custom_call.1} parent=0
    #allocation2 [shape = 'u8[16384]{0}', space=vmem, size = 0x4000, scoped, tag = 'output window, operand 1']
    #allocation3 [shape = 's32[2]{0}', space=sflag, size = 0x8, scoped, tag = 'scoped memory for tpu_custom_call.1']
    %9 = vsyncpa [#allocation3], 0
    %s10 = scalar_lea.sflag [#allocation3], 1
    %11 = vsyncpa %s10, 0
    loop: start=0, step=1, limit=4
    $region2: #{tpu_custom_call.1} parent=1 // loop_pre_header
      _
    $region3: #{tpu_custom_call.1} parent=1 // loop_header
      %s13 = sphi 0, %s17
      %p14 = scmp.ge.s32.totalorder %s13, 4
      %s20 = sphi 0, %s32
      %s21 = sphi 0, %s28
      %s22 = sphi 0, %s20
      %s23 = sphi 0, %s21
      %s24 = sphi 0, %s22
      %s25 = sphi 0, %s23
      %s37 = sphi 0, %s39
      %s40 = sphi 0, %s37
      %s41 = sphi 0, %s40
      %s57 = sphi 0, %s41
      %s63 = sphi 0, %s65
      %s66 = sphi 0, %s63
      %s67 = sphi 0, %s66
      %s83 = sphi 0, %s67
      %s91 = sphi 0, %s93
      %s94 = sphi 0, %s91
      %s95 = sphi 0, %s94
      %s111 = sphi 0, %s95
      %s119 = sphi 0, %s121
      %s122 = sphi 0, %s119
      %s123 = sphi 0, %s122
      %s139 = sphi 0, %s123
    $region4: #{tpu_custom_call.1} parent=1 // loop_header_branch
      %16 = sbr.rel (%p14) target = $region8
    $region5: #{tpu_custom_call.1} parent=1 // loop_body
      %s18 = ssub.s32 %s13, 1
      %s19 = ssub.s32 %s13, 2
      %s26 = sadd.s32 1, %s21
      %p27 = scmp.ge.s32.totalorder %s26, 1
      %s28 = scalar_select %p27, 0, %s26
      %s29 = sadd.s32 1, %s20
      %s30 = scalar_select %p27, %s29, %s20
      %p31 = scmp.ge.s32.totalorder %s30, 2
      %s32 = scalar_select %p31, 0, %s30
      %s33 = ssub.s32 %s20, %s32
      %s34 = ssub.s32 %s21, %s28
      %s35 = sor.u32 %s33, %s34
      %p36 = scmp.eq.s32.totalorder %s35, 0
      %s38 = sadd.s32 %s37, 1
      %s39 = scalar_select %p36, %s37, %s38
      %p42 = pneg %p36
      %p43 = scmp.eq.s32.totalorder %s13, 1
      %p44 = por %p42, %p43
      %p45 = scmp.ne.s32.totalorder %s37, %s40
      %p46 = scmp.eq.s32.totalorder %s13, 0
      %p47 = por %p45, %p46
      %p48 = scmp.ne.s32.totalorder %s37, %s40
      %p49 = scmp.eq.s32.totalorder %s18, 1
      %p50 = por %p48, %p49
      %p51 = scmp.ne.s32.totalorder %s40, %s41
      %p52 = scmp.eq.s32.totalorder %s18, 0
      %p53 = por %p51, %p52
      %p54 = scmp.ne.s32.totalorder %s40, %s41
      %p55 = scmp.eq.s32.totalorder %s19, 1
      %p56 = por %p54, %p55
      %p58 = scmp.ne.s32.totalorder %s41, %s57
      %p59 = scmp.eq.s32.totalorder %s19, 0
      %p60 = por %p58, %p59
      %s61 = ssub.s32 %s20, %s32
      %p62 = scmp.eq.s32.totalorder %s61, 0
      %s64 = sadd.s32 %s63, 1
      %s65 = scalar_select %p62, %s63, %s64
      %p68 = pneg %p62
      %p69 = scmp.eq.s32.totalorder %s13, 1
      %p70 = por %p68, %p69
      %p71 = scmp.ne.s32.totalorder %s63, %s66
      %p72 = scmp.eq.s32.totalorder %s13, 0
      %p73 = por %p71, %p72
      %p74 = scmp.ne.s32.totalorder %s63, %s66
      %p75 = scmp.eq.s32.totalorder %s18, 1
      %p76 = por %p74, %p75
      %p77 = scmp.ne.s32.totalorder %s66, %s67
      %p78 = scmp.eq.s32.totalorder %s18, 0
      %p79 = por %p77, %p78
      %p80 = scmp.ne.s32.totalorder %s66, %s67
      %p81 = scmp.eq.s32.totalorder %s19, 1
      %p82 = por %p80, %p81
      %p84 = scmp.ne.s32.totalorder %s67, %s83
      %p85 = scmp.eq.s32.totalorder %s19, 0
      %p86 = por %p84, %p85
      %s87 = ssub.s32 %s20, %s32
      %s88 = ssub.s32 %s21, %s28
      %s89 = sor.u32 %s87, %s88
      %p90 = scmp.eq.s32.totalorder %s89, 0
      %s92 = sadd.s32 %s91, 1
      %s93 = scalar_select %p90, %s91, %s92
      %p96 = pneg %p90
      %p97 = scmp.eq.s32.totalorder %s13, 1
      %p98 = por %p96, %p97
      %p99 = scmp.ne.s32.totalorder %s91, %s94
      %p100 = scmp.eq.s32.totalorder %s13, 0
      %p101 = por %p99, %p100
      %p102 = scmp.ne.s32.totalorder %s91, %s94
      %p103 = scmp.eq.s32.totalorder %s18, 1
      %p104 = por %p102, %p103
      %p105 = scmp.ne.s32.totalorder %s94, %s95
      %p106 = scmp.eq.s32.totalorder %s18, 0
      %p107 = por %p105, %p106
      %p108 = scmp.ne.s32.totalorder %s94, %s95
      %p109 = scmp.eq.s32.totalorder %s19, 1
      %p110 = por %p108, %p109
      %p112 = scmp.ne.s32.totalorder %s95, %s111
      %p113 = scmp.eq.s32.totalorder %s19, 0
      %p114 = por %p112, %p113
      %s115 = ssub.s32 %s20, %s32
      %s116 = ssub.s32 %s21, %s28
      %s117 = sor.u32 %s115, %s116
      %p118 = scmp.eq.s32.totalorder %s117, 0
      %s120 = sadd.s32 %s119, 1
      %s121 = scalar_select %p118, %s119, %s120
      %p124 = pneg %p118
      %p125 = scmp.eq.s32.totalorder %s13, 1
      %p126 = por %p124, %p125
      %p127 = scmp.ne.s32.totalorder %s119, %s122
      %p128 = scmp.eq.s32.totalorder %s13, 0
      %p129 = por %p127, %p128
      %p130 = scmp.ne.s32.totalorder %s119, %s122
      %p131 = scmp.eq.s32.totalorder %s18, 1
      %p132 = por %p130, %p131
      %p133 = scmp.ne.s32.totalorder %s122, %s123
      %p134 = scmp.eq.s32.totalorder %s18, 0
      %p135 = por %p133, %p134
      %p136 = scmp.ne.s32.totalorder %s122, %s123
      %p137 = scmp.eq.s32.totalorder %s19, 1
      %p138 = por %p136, %p137
      %p140 = scmp.ne.s32.totalorder %s123, %s139
      %p141 = scmp.eq.s32.totalorder %s19, 0
      %p142 = por %p140, %p141
      %p143 = scmp.le.s32.totalorder 1, %s13
      %p144 = scmp.lt.s32.totalorder %s13, 3
      %p145 = pnand %p143, %p144
      %p146 = pneg %p145
      // Predicated region
      $region9: #{tpu_custom_call.1} parent=5 // pred_check
        _
      $region10: #{tpu_custom_call.1} parent=5 // pred_check_branch
        %148 = sbr.rel (%p145) target = $region12
      $region11: #{tpu_custom_call.1} parent=5 // pred_region
        %s149 = ssub.s32 %s13, 1
      $region12: #{tpu_custom_call.1} parent=5 // pred_fallthru
        _
      %p150 = scmp.lt.s32.totalorder %s13, 2
      // Predicated region
      $region13: #{tpu_custom_call.1} parent=5 // pred_check
        %p151 = pneg %p150
      $region14: #{tpu_custom_call.1} parent=5 // pred_check_branch
        %153 = sbr.rel (%p151) target = $region16
      $region15: #{tpu_custom_call.1} parent=5 // pred_region
        // Predicated region
        $region17: #{tpu_custom_call.1} parent=15 // pred_check
          %p154 = pneg %p47
        $region18: #{tpu_custom_call.1} parent=15 // pred_check_branch
          %156 = sbr.rel (%p154) target = $region20
        $region19: #{tpu_custom_call.1} parent=15 // pred_region
          %s157 = smul.u32 2, %s21
          %p158 = scmp.lt.s32.totalorder %s20, 1
          %s159 = scalar_select %p158, %s20, 1
          %p160 = scmp.lt.s32.totalorder %s157, 1
          %s161 = scalar_select %p160, %s157, 1
          %s162 = smul.addr %s159, 2
          %s163 = sadd.s32 %s161, %s162
          %s164 = smul.addr %s163, 4
          %s165 = scalar_lea.vmem %s0, %s164
          %s166 = smul.u32 2, %s21
        $region20: #{tpu_custom_call.1} parent=15 // pred_fallthru
          _
        // Predicated region
        $region21: #{tpu_custom_call.1} parent=15 // pred_check
          %p167 = pneg %p73
        $region22: #{tpu_custom_call.1} parent=15 // pred_check_branch
          %169 = sbr.rel (%p167) target = $region24
        $region23: #{tpu_custom_call.1} parent=15 // pred_region
          %p170 = scmp.lt.s32.totalorder %s20, 1
          %s171 = scalar_select %p170, %s20, 1
          %s172 = smul.addr %s171, 2
          %s173 = smul.addr %s172, 8
          %s174 = scalar_lea.vmem %s1, %s173
        $region24: #{tpu_custom_call.1} parent=15 // pred_fallthru
          _
      $region16: #{tpu_custom_call.1} parent=5 // pred_fallthru
        _
      %p175 = scmp.le.s32.totalorder 1, %s13
      %p176 = scmp.lt.s32.totalorder %s13, 3
      %p177 = pnand %p175, %p176
      %p178 = pneg %p177
      // Predicated region
      $region25: #{tpu_custom_call.1} parent=5 // pred_check
        _
      $region26: #{tpu_custom_call.1} parent=5 // pred_check_branch
        %180 = sbr.rel (%p177) target = $region28
      $region27: #{tpu_custom_call.1} parent=5 // pred_region
        %s181 = ssub.s32 %s13, 1
        %s182 = smul.u32 2, %s23
        %p183 = scmp.lt.s32.totalorder %s22, 1
        %s184 = scalar_select %p183, %s22, 1
        %p185 = scmp.lt.s32.totalorder %s182, 1
        %s186 = scalar_select %p185, %s182, 1
        %s187 = smul.addr %s184, 2
        %s188 = sadd.s32 %s186, %s187
        %s189 = smul.addr %s188, 4
        %s190 = scalar_lea.vmem %s0, %s189
        %p191 = pneg %p53
        %p192 = pneg %p50
        %p193 = scmp.lt.s32.totalorder %s22, 1
        %s194 = scalar_select %p193, %s22, 1
        %s195 = smul.addr %s194, 2
        %s196 = smul.addr %s195, 8
        %s197 = scalar_lea.vmem %s1, %s196
        %p198 = pneg %p79
        %p199 = pneg %p76
        %p200 = pneg %p107
        %p201 = pneg %p104
        %s202 = smul.u32 2, %s23
        %p203 = scmp.lt.s32.totalorder %s22, 1
        %s204 = scalar_select %p203, %s22, 1
        %p205 = scmp.lt.s32.totalorder %s202, 1
        %s206 = scalar_select %p205, %s202, 1
        %s207 = smul.addr %s204, 2
        %s208 = sadd.s32 %s206, %s207
        %s209 = smul.addr %s208, 8
        %s210 = scalar_lea.vmem %s2, %s209
        %p211 = pneg %p135
        %p212 = pneg %p132
        %s213 = sand.u32 %s122, 1
        %s214 = scalar_lea.sflag [#allocation3], %s213
        %s215 = sand.u32 %s122, 1
        %s216 = smul.addr %s215, 16
        %s217 = scalar_lea.vmem [#allocation2], %s216
        %s218 = smul.u32 2, %s23
        %p219 = scmp.lt.s32.totalorder %s22, 1
        %s220 = scalar_select %p219, %s22, 1
        %p221 = scmp.lt.s32.totalorder %s218, 1
        %s222 = scalar_select %p221, %s218, 1
        %s223 = smul.addr %s220, 2
        %s224 = sadd.s32 %s222, %s223
        %s225 = smul.addr %s224, 4
        %s226 = scalar_lea.vmem %s0, %s225
        %s227 = smul.u32 2, %s23
        %p228 = scmp.lt.s32.totalorder %s22, 1
        %s229 = scalar_select %p228, %s22, 1
        %s230 = smul.addr %s229, 2
        %s231 = smul.addr %s230, 8
        %s232 = scalar_lea.vmem %s1, %s231
        %s233 = smul.u32 2, %s23
        %p234 = scmp.lt.s32.totalorder %s22, 1
        %s235 = scalar_select %p234, %s22, 1
        %p236 = scmp.lt.s32.totalorder %s233, 1
        %s237 = scalar_select %p236, %s233, 1
        %s238 = smul.addr %s235, 2
        %s239 = sadd.s32 %s237, %s238
        %s240 = smul.addr %s239, 8
        %s241 = scalar_lea.vmem %s2, %s240
        %s242 = smul.u32 2, %s23
        %s243 = smul.u32 2, %s23
        %v244 = vld [vmem:[%s226] sm:$0xff]
        %v245 = vld [vmem:[%s232] sm:$0xff]
        %v246 = vld [vmem:[%s232 + $0x8] sm:$0x1]
        %v248 = vcombine.high %v244, %v244
        %vm249 = vcmask 31744
        %v251 = vsel %vm249, %v245, 0
        %v254 = vsel %vm249, %v246, 0
        %vm256 = vcmask 1043456
        %v257 = vsel %vm256, %v244, 0
        %v259 = vsel %vm256, %v248, 0
        %261 = vmatprep.subr.mxu0 %v259
        %262 = vmatpush1.msra.mxu0 %v257
        %263 = vmatprep.subr.mxu0 0.0
        %264 = vmatpush1.msra.mxu0 0.0
        %265 = vmatprep.subr.mxu0 0.0
        %266 = vmatpush1.msra.mxu0 0.0
        %267 = vmatprep.subr.mxu0 0.0
        %268 = vmatpush1.msra.mxu0 0.0
        %269 = vmatprep.subr.mxu0 0.0
        %270 = vmatpush1.msra.mxu0 0.0
        %271 = vmatprep.subr.mxu0 0.0
        %272 = vmatpush1.msra.mxu0 0.0
        %273 = vmatprep.subr.mxu0 0.0
        %274 = vmatpush1.msra.mxu0 0.0
        %275 = vmatprep.subr.mxu0 0.0
        %276 = vmatpush1.msra.mxu0 0.0
        %277 = vmatprep.subr.mxu0 0.0
        %278 = vmatpush1.msra.mxu0 0.0
        %279 = vmatprep.subr.mxu0 0.0
        %280 = vmatpush1.msra.mxu0 0.0
        %281 = vmatprep.subr.mxu0 0.0
        %282 = vmatpush1.msra.mxu0 0.0
        %283 = vmatprep.subr.mxu0 0.0
        %284 = vmatpush1.msra.mxu0 0.0
        %285 = vmatprep.subr.mxu0 0.0
        %286 = vmatpush1.msra.mxu0 0.0
        %287 = vmatprep.subr.mxu0 0.0
        %288 = vmatpush1.msra.mxu0 0.0
        %289 = vmatprep.subr.mxu0 0.0
        %290 = vmatpush1.msra.mxu0 0.0
        %291 = vmatprep.subr.mxu0 0.0
        %292 = vmatpush1.msra.mxu0 0.0
        %293 = vmatprep.subr.mxu0 0.0
        %294 = vmatpush1.msra.mxu0 0.0
        %295 = vmatprep.subr.mxu0 0.0
        %296 = vmatpush1.msra.mxu0 0.0
        %297 = vmatprep.subr.mxu0 0.0
        %298 = vmatpush1.msra.mxu0 0.0
        %299 = vmatprep.subr.mxu0 0.0
        %300 = vmatpush1.msra.mxu0 0.0
        %301 = vmatprep.subr.mxu0 0.0
        %302 = vmatpush1.msra.mxu0 0.0
        %303 = vmatprep.subr.mxu0 0.0
        %304 = vmatpush1.msra.mxu0 0.0
        %305 = vmatprep.subr.mxu0 0.0
        %306 = vmatpush1.msra.mxu0 0.0
        %307 = vmatprep.subr.mxu0 0.0
        %308 = vmatpush1.msra.mxu0 0.0
        %309 = vmatprep.subr.mxu0 0.0
        %310 = vmatpush1.msra.mxu0 0.0
        %311 = vmatprep.subr.mxu0 0.0
        %312 = vmatpush1.msra.mxu0 0.0
        %313 = vmatprep.subr.mxu0 0.0
        %314 = vmatpush1.msra.mxu0 0.0
        %315 = vmatprep.subr.mxu0 0.0
        %316 = vmatpush1.msra.mxu0 0.0
        %317 = vmatprep.subr.mxu0 0.0
        %318 = vmatpush1.msra.mxu0 0.0
        %319 = vmatprep.subr.mxu0 0.0
        %320 = vmatpush1.msra.mxu0 0.0
        %321 = vmatprep.subr.mxu0 0.0
        %322 = vmatpush1.msra.mxu0 0.0
        %323 = vmatprep.subr.mxu0 0.0
        %324 = vmatpush1.msra.mxu0 0.0
        %325 = vmatprep.mubr.f32.mxu0 0.0
        %326 = vmatmul.mubr.f32.gmra.mrb[0].mxu0 %v251
        %v327 = vpop.f32.mrb[0].mxu0
        %v328 = vadd.f32 0.0, %v327
        %v329 = vpop.f32.mrb[0].mxu0
        %v330 = vadd.f32 0.0, %v329
        %331 = vmatprep.mubr.f32.mxu0 0.0
        %332 = vmatmul.mubr.f32.gmra.mrb[0].mxu0 %v254
        %v333 = vpop.f32.mrb[0].mxu0
        %v334 = vadd.f32 0.0, %v333
        %v335 = vpop.f32.mrb[0].mxu0
        %v336 = vadd.f32 0.0, %v335
        %337 = vdwg.mxu0
        %338 = vst [vmem:[%s217] sm:$0xff] %v328
        %339 = vst [vmem:[%s217 + $0x8] sm:$0xff] %v330
        %341 = vst [vmem:[%s241] sm:$0xf] %v244
        %342 = vst [vmem:[%s241 + $0x8] sm:$0xf] %v248
        %v345 = vcombine.low %v334, %v336
        %v347 = vunpack.c.l.s4 1966171168
        %v348 = vunpack.c.0.s8 %v347
        %v349 = vlaneseq
        %v350 = vshrl.u32 %v349, 7
        %v351 = vsub.s32 %v348, %v350
        %v352 = vrot.slane %v345, %v351
        %v354 = vunpack.c.l.s4 1966171168
        %v355 = vunpack.c.0.s8 %v354
        %v356 = vlaneseq
        %v357 = vshrl.u32 %v356, 7
        %v358 = vsub.s32 %v355, %v357
        %v359 = vrot.slane %v352, %v358
        %v361 = vlaneseq
        %vm362 = vcmp.ge.s32.totalorder %v361, 0
        %vm363 = vcmp.lt.s32.totalorder %v361, 256
        %vm364 = vmand %vm362, %vm363
        %s365 = scalar_lea.vmem %s241, 4
        %366 = vst.msk [vmem:[%s365] ss:$8 sm:$0x3] %vm364, %v359
        %367 = vst.msk [vmem:[%s365] ss:$8 sm:$0x0] %vm364, %v359
        %s368 = smul.u32 2, %s23
        %p369 = scmp.lt.s32.totalorder %s22, 1
        %s370 = scalar_select %p369, %s22, 1
        %p371 = scmp.lt.s32.totalorder %s368, 1
        %s372 = scalar_select %p371, %s368, 1
        %s373 = smul.addr %s370, 2
        %s374 = sadd.s32 %s372, %s373
        %s375 = smul.addr %s374, 8
        %s376 = scalar_lea.vmem %s2, %s375
        %s377 = sand.u32 %s122, 1
        %s378 = scalar_lea.sflag [#allocation3], %s377
        %s379 = sand.u32 %s122, 1
        %s380 = smul.addr %s379, 16
        %s381 = scalar_lea.vmem [#allocation2], %s380
        // Predicated region
        $region29: #{tpu_custom_call.1} parent=27 // pred_check
          %p382 = pneg %p104
        $region30: #{tpu_custom_call.1} parent=27 // pred_check_branch
          %384 = sbr.rel (%p382) target = $region32
        $region31: #{tpu_custom_call.1} parent=27 // pred_region
          %s385 = smul.u32 2, %s23
        $region32: #{tpu_custom_call.1} parent=27 // pred_fallthru
          _
        // Predicated region
        $region33: #{tpu_custom_call.1} parent=27 // pred_check
          %p386 = pneg %p132
        $region34: #{tpu_custom_call.1} parent=27 // pred_check_branch
          %388 = sbr.rel (%p386) target = $region36
        $region35: #{tpu_custom_call.1} parent=27 // pred_region
          %s389 = smul.u32 2, %s23
          %s391 = ssub.s32 256, 256
          %392 = vsyncadd %s378, %s391
          %s393 = smul.addr %s22, 2
          %s394 = sadd.s32 %s389, %s393
          %s395 = smul.addr %s394, 128
          %s396 = scalar_lea.hbm %s3, %s395
          %s398 = sshll.u32 %s381, 4
          %s399 = int_to_ptr.vmem [resolvable:$true] %s398
          %401 = dma.vmem_to_hbm [thread:$0]  %s399, 256, %s396, %s378
        $region36: #{tpu_custom_call.1} parent=27 // pred_fallthru
          _
      $region28: #{tpu_custom_call.1} parent=5 // pred_fallthru
        _
      %p402 = scmp.le.s32.totalorder 2, %s13
      // Predicated region
      $region37: #{tpu_custom_call.1} parent=5 // pred_check
        %p403 = pneg %p402
      $region38: #{tpu_custom_call.1} parent=5 // pred_check_branch
        %405 = sbr.rel (%p403) target = $region40
      $region39: #{tpu_custom_call.1} parent=5 // pred_region
        %s406 = ssub.s32 %s13, 2
        // Predicated region
        $region41: #{tpu_custom_call.1} parent=39 // pred_check
          %p407 = pneg %p110
        $region42: #{tpu_custom_call.1} parent=39 // pred_check_branch
          %409 = sbr.rel (%p407) target = $region44
        $region43: #{tpu_custom_call.1} parent=39 // pred_region
          %s410 = smul.u32 2, %s25
          %p411 = scmp.lt.s32.totalorder %s24, 1
          %s412 = scalar_select %p411, %s24, 1
          %p413 = scmp.lt.s32.totalorder %s410, 1
          %s414 = scalar_select %p413, %s410, 1
          %s415 = smul.addr %s412, 2
          %s416 = sadd.s32 %s414, %s415
          %s417 = smul.addr %s416, 8
          %s418 = scalar_lea.vmem %s2, %s417
        $region44: #{tpu_custom_call.1} parent=39 // pred_fallthru
          _
        // Predicated region
        $region45: #{tpu_custom_call.1} parent=39 // pred_check
          %p419 = pneg %p138
        $region46: #{tpu_custom_call.1} parent=39 // pred_check_branch
          %421 = sbr.rel (%p419) target = $region48
        $region47: #{tpu_custom_call.1} parent=39 // pred_region
          %s422 = sand.u32 %s123, 1
          %s423 = scalar_lea.sflag [#allocation3], %s422
          %s424 = sand.u32 %s123, 1
          %s425 = smul.addr %s424, 16
          %s426 = scalar_lea.vmem [#allocation2], %s425
          %427 = dma.done %s423, 256
        $region48: #{tpu_custom_call.1} parent=39 // pred_fallthru
          _
      $region40: #{tpu_custom_call.1} parent=5 // pred_fallthru
        _
    $region6: #{tpu_custom_call.1} parent=1 // loop_footer
      %s17 = sadd.s32 1, %s13
    $region7: #{tpu_custom_call.1} parent=1 // loop_footer_branch
      %12 = sbr.rel target = $region3
    $region8: #{tpu_custom_call.1} parent=1 // loop_exit
      _
    %428 = vsyncpa [#allocation3], 1
    %s429 = scalar_lea.sflag [#allocation3], 1
    %430 = vsyncpa %s429, 1

</llo_original>
